<compile_context>
chip_gen: v6e
topology: v6e:2x2x1
jax: 0.10.0
libtpu: 0.0.40
codegen_flags: <defaults>
</compile_context>

<pallas_src>
import jax
import jax.numpy as jnp
from jax.experimental import pallas as pl
from jax.experimental.pallas import tpu as pltpu


def _round_up(n, m):
    return ((n + m - 1) // m) * m


# ----------------------------- Pallas kernel ---------------------------------
def _fused_xas_kernel(ids_ref, x_ref,
                      w0x_ref, bias0_ref,
                      w1_ref, b1_ref,
                      w2_ref, b2_ref,
                      w3_ref, b3_ref,
                      out_ref):
    """Fused embedding-lookup + 4-layer MLP for one batch tile.

    Embedding + concat + layer-0 bias are fused into a single gather of a
    precomputed per-element bias table (emb_table @ w0e + b0), expressed as a
    tiny one-hot matmul (exact: 0/1 times f32, f32 accumulate). Everything runs
    on MXU/VPU/EUP with no data-dependent indexing.
    """
    tb = ids_ref.shape[0]
    n_elem = bias0_ref.shape[0]

    # --- fused embedding lookup -> layer-0 bias -------------------------------
    ids = ids_ref[...]                                                  # (TB, 1) int32
    iota = jax.lax.broadcasted_iota(jnp.int32, (tb, n_elem), 1)         # (TB, n_elem)
    onehot = (ids == iota).astype(jnp.float32)                          # (TB, n_elem)

    # --- layer 0: x @ w0x + onehot @ bias0_table -> SiLU -----------------------
    h = (jnp.dot(x_ref[...].astype(jnp.bfloat16), w0x_ref[...],
                 preferred_element_type=jnp.float32)
         + jnp.dot(onehot, bias0_ref[...],
                   preferred_element_type=jnp.float32))                 # (TB, H0) f32
    h = h * jax.nn.sigmoid(h)                                           # SiLU in f32

    # --- layer 1: Linear -> SiLU ------------------------------------------------
    h = jnp.dot(h.astype(jnp.bfloat16), w1_ref[...],
                preferred_element_type=jnp.float32) + b1_ref[...]
    h = h * jax.nn.sigmoid(h)

    # --- layer 2: Linear -> SiLU ------------------------------------------------
    h = jnp.dot(h.astype(jnp.bfloat16), w2_ref[...],
                preferred_element_type=jnp.float32) + b2_ref[...]
    h = h * jax.nn.sigmoid(h)

    # --- output layer: Linear -> Softplus ---------------------------------------
    h = jnp.dot(h.astype(jnp.bfloat16), w3_ref[...],
                preferred_element_type=jnp.float32) + b3_ref[...]
    out_ref[...] = jax.nn.softplus(h).astype(out_ref.dtype)


# ------------------------------ Wrapper ---------------------------------------
def element_embedding_forward(x, element_ids, params, *, block_rows=2048,
                              out_dtype=jnp.bfloat16):
    """Forward pass of ElementEmbeddingModule, fully inside one pallas_call.

    x:           (B, feature_dim) float32 or bfloat16 (bf16 at rest preferred)
    element_ids: (B, 1) int32
    """
    B, F = x.shape
    out_dim = params["w3"].shape[1]

    # Batch tile: multiple of 8 sublanes, capped at block_rows, sized so the grid
    # has >= 2 steps when B allows it (v7x: 2 TensorCores share the parallel axis).
    TB = min(block_rows, max(8, _round_up(pl.cdiv(B, 2), 8)))
    grid = (pl.cdiv(B, TB),)   # ragged tail is clipped by Pallas; no jnp.pad copy

    row_map = lambda i: (i, 0)     # streamed per batch tile
    fixed = lambda i: (0, 0)       # same block every step -> resident in VMEM

    def full_spec(a):
        return pl.BlockSpec(a.shape, fixed)

    return pl.pallas_call(
        _fused_xas_kernel,
        out_shape=jax.ShapeDtypeStruct((B, out_dim), out_dtype),
        grid=grid,
        in_specs=[
            pl.BlockSpec((TB, 1), row_map),          # element_ids
            pl.BlockSpec((TB, F), row_map),          # x
            full_spec(params["w0x"]),                # (F, H0) bf16
            full_spec(params["bias0"]),              # (num_elements, H0) f32, folded
            full_spec(params["w1"]), full_spec(params["b1"]),
            full_spec(params["w2"]), full_spec(params["b2"]),
            full_spec(params["w3"]), full_spec(params["b3"]),
        ],
        out_specs=pl.BlockSpec((TB, out_dim), row_map),   # lane-dense (out_dim % 128 == 0)
        compiler_params=pltpu.CompilerParams(
            dimension_semantics=("parallel",)),           # shard batch tiles across TCs
    )(element_ids, x, params["w0x"], params["bias0"],
      params["w1"], params["b1"],
      params["w2"], params["b2"],
      params["w3"], params["b3"])


# ------------------------- Deterministic parameters ---------------------------
def init_params(key, num_elements, embedding_dim, feature_dim, hidden_dims, output_dim):
    dims = [feature_dim + embedding_dim] + list(hidden_dims) + [output_dim]
    keys = jax.random.split(key, 2 * len(dims))
    params = {}
    # element embedding table ~ N(0, 1) like nn.Embedding default (kept f32 for the fold).
    emb_table = jax.random.normal(keys[0], (num_elements, embedding_dim), dtype=jnp.float32)
    # Linear layers: uniform(-1/sqrt(fan_in), 1/sqrt(fan_in)), stored (in, out).
    # Weights bf16 (MXU-native), biases f32.
    for i in range(len(dims) - 1):
        fan_in, fan_out = dims[i], dims[i + 1]
        bound = 1.0 / jnp.sqrt(jnp.float32(fan_in))
        w = jax.random.uniform(keys[2 * i + 1], (fan_in, fan_out), jnp.float32, -bound, bound)
        b = jax.random.uniform(keys[2 * i + 2], (1, fan_out), jnp.float32, -bound, bound)
        if i == 0:
            # Split layer-0 weight into feature / embedding halves (fused concat) and
            # fold the embedding half + bias into a per-element bias table:
            #   bias0_table[e] = emb_table[e] @ w0e + b0          (num_elements, H0) f32
            params["w0x"] = w[:feature_dim].astype(jnp.bfloat16)
            params["bias0"] = (emb_table @ w[feature_dim:] + b).astype(jnp.float32)
        else:
            params[f"w{i}"] = w.astype(jnp.bfloat16)
            params[f"b{i}"] = b
    return params


# ------------------------------ Reference -------------------------------------
def reference_forward(x, element_ids, params):
    """Plain-JAX reference with the same mixed precision (bf16 weights, f32 accum)."""
    bias0 = jnp.take(params["bias0"], element_ids[:, 0], axis=0)        # (B, H0) f32

    def dense(h, w, b):
        return jnp.dot(h.astype(jnp.bfloat16), w,
                       preferred_element_type=jnp.float32) + b

    h = jnp.dot(x.astype(jnp.bfloat16), params["w0x"],
                preferred_element_type=jnp.float32) + bias0
    h = h * jax.nn.sigmoid(h)
    h = dense(h, params["w1"], params["b1"]); h = h * jax.nn.sigmoid(h)
    h = dense(h, params["w2"], params["b2"]); h = h * jax.nn.sigmoid(h)
    h = dense(h, params["w3"], params["b3"])
    return jax.nn.softplus(h)


# -------------------------------- Main -----------------------------------------
if __name__ == "__main__":
    # Small shapes consistent with the module's forward. hidden_dims / output_dim
    # are constructor args in the module (defaults 300/360); kept lane-aligned here.
    B = 8
    num_elements = 8
    embedding_dim = 16
    feature_dim = 64
    hidden_dims = [128, 128, 128]
    output_dim = 256

    key = jax.random.PRNGKey(0)
    k_param, k_x, k_ids = jax.random.split(key, 3)

    params = init_params(k_param, num_elements, embedding_dim,
                         feature_dim, hidden_dims, output_dim)
    # x kept bf16 at rest (upstream-producer dtype) — halves the HBM input stream.
    x = jax.random.normal(k_x, (B, feature_dim), dtype=jnp.float32).astype(jnp.bfloat16)
    element_ids = jax.random.randint(k_ids, (B, 1), 0, num_elements, dtype=jnp.int32)

    out = element_embedding_forward(x, element_ids, params)
    out = jax.block_until_ready(out)

    ref = jax.block_until_ready(reference_forward(x, element_ids, params))
    assert out.shape == (B, output_dim)
    assert out.dtype == jnp.bfloat16
    assert jnp.allclose(out.astype(jnp.float32), ref, atol=1e-2, rtol=1e-2), \
        "mismatch vs reference"

    print("KERNEL_OK")
</pallas_src>

<mosaic_0001>
module attributes {stable_mosaic.version = 11 : i64} {
  func.func @_fused_xas_kernel(%arg0: i32, %arg1: memref<8x1xi32, #tpu.memory_space<vmem>>, %arg2: memref<8x64xbf16, #tpu.memory_space<vmem>>, %arg3: memref<64x128xbf16, #tpu.memory_space<vmem>>, %arg4: memref<8x128xf32, #tpu.memory_space<vmem>>, %arg5: memref<128x128xbf16, #tpu.memory_space<vmem>>, %arg6: memref<1x128xf32, #tpu.memory_space<vmem>>, %arg7: memref<128x128xbf16, #tpu.memory_space<vmem>>, %arg8: memref<1x128xf32, #tpu.memory_space<vmem>>, %arg9: memref<128x256xbf16, #tpu.memory_space<vmem>>, %arg10: memref<1x256xf32, #tpu.memory_space<vmem>>, %arg11: memref<8x256xbf16, #tpu.memory_space<vmem>>) attributes {dimension_semantics = [#tpu.dimension_semantics<parallel>], iteration_bounds = array<i64: 1>, scalar_prefetch = 0 : i64, scratch_operands = 0 : i64, tpu.core_type = #tpu.core_type<tc>, window_params = [{transform_indices = @transform_0, window_bounds = array<i64: 8, 1>}, {transform_indices = @transform_1, window_bounds = array<i64: 8, 64>}, {pipeline_mode = #tpu.pipeline_mode<synchronous>, transform_indices = @transform_2, window_bounds = array<i64: 64, 128>}, {pipeline_mode = #tpu.pipeline_mode<synchronous>, transform_indices = @transform_3, window_bounds = array<i64: 8, 128>}, {pipeline_mode = #tpu.pipeline_mode<synchronous>, transform_indices = @transform_4, window_bounds = array<i64: 128, 128>}, {pipeline_mode = #tpu.pipeline_mode<synchronous>, transform_indices = @transform_5, window_bounds = array<i64: 1, 128>}, {pipeline_mode = #tpu.pipeline_mode<synchronous>, transform_indices = @transform_6, window_bounds = array<i64: 128, 128>}, {pipeline_mode = #tpu.pipeline_mode<synchronous>, transform_indices = @transform_7, window_bounds = array<i64: 1, 128>}, {pipeline_mode = #tpu.pipeline_mode<synchronous>, transform_indices = @transform_8, window_bounds = array<i64: 128, 256>}, {pipeline_mode = #tpu.pipeline_mode<synchronous>, transform_indices = @transform_9, window_bounds = array<i64: 1, 256>}, {transform_indices = @transform_10, window_bounds = array<i64: 8, 256>}]} {
    %c0 = arith.constant 0 : index
    %c0_0 = arith.constant 0 : index
    %0 = vector.load %arg1[%c0, %c0_0] : memref<8x1xi32, #tpu.memory_space<vmem>>, vector<8x1xi32>
    %1 = tpu.iota {dimensions = array<i32: 1>} : vector<8x8xi32>
    %2 = vector.broadcast %0 : vector<8x1xi32> to vector<8x8xi32>
    %3 = arith.cmpi eq, %2, %1 : vector<8x8xi32>
    %4 = arith.extui %3 : vector<8x8xi1> to vector<8x8xi32>
    %5 = arith.sitofp %4 : vector<8x8xi32> to vector<8x8xf32>
    %c0_1 = arith.constant 0 : index
    %c0_2 = arith.constant 0 : index
    %6 = vector.load %arg2[%c0_1, %c0_2] : memref<8x64xbf16, #tpu.memory_space<vmem>>, vector<8x64xbf16>
    %c0_3 = arith.constant 0 : index
    %c0_4 = arith.constant 0 : index
    %7 = vector.load %arg3[%c0_3, %c0_4] : memref<64x128xbf16, #tpu.memory_space<vmem>>, vector<64x128xbf16>
    %cst = arith.constant dense<0.000000e+00> : vector<8x128xf32>
    %8 = tpu.matmul %6, %7, %cst {dimension_numbers = #tpu.dot_dimension_numbers<[1], [0], [0], [1], [0, 0, 1, 1], [], []>} : vector<8x64xbf16>, vector<64x128xbf16>, vector<8x128xf32> -> vector<8x128xf32>
    %c0_5 = arith.constant 0 : index
    %c0_6 = arith.constant 0 : index
    %9 = vector.load %arg4[%c0_5, %c0_6] : memref<8x128xf32, #tpu.memory_space<vmem>>, vector<8x128xf32>
    %cst_7 = arith.constant dense<0.000000e+00> : vector<8x128xf32>
    %10 = tpu.matmul %5, %9, %cst_7 {dimension_numbers = #tpu.dot_dimension_numbers<[1], [0], [0], [1], [0, 0, 1, 1], [], []>} : vector<8x8xf32>, vector<8x128xf32>, vector<8x128xf32> -> vector<8x128xf32>
    %11 = arith.addf %8, %10 : vector<8x128xf32>
    %12 = arith.negf %11 : vector<8x128xf32>
    %13 = math.exp %12 : vector<8x128xf32>
    %cst_8 = arith.constant 1.000000e+00 : f32
    %14 = vector.broadcast %cst_8 : f32 to vector<8x128xf32>
    %15 = arith.addf %14, %13 : vector<8x128xf32>
    %16 = arith.divf %14, %15 : vector<8x128xf32>
    %17 = arith.mulf %11, %16 : vector<8x128xf32>
    %18 = arith.truncf %17 : vector<8x128xf32> to vector<8x128xbf16>
    %c0_9 = arith.constant 0 : index
    %c0_10 = arith.constant 0 : index
    %19 = vector.load %arg5[%c0_9, %c0_10] : memref<128x128xbf16, #tpu.memory_space<vmem>>, vector<128x128xbf16>
    %cst_11 = arith.constant dense<0.000000e+00> : vector<8x128xf32>
    %20 = tpu.matmul %18, %19, %cst_11 {dimension_numbers = #tpu.dot_dimension_numbers<[1], [0], [0], [1], [0, 0, 1, 1], [], []>} : vector<8x128xbf16>, vector<128x128xbf16>, vector<8x128xf32> -> vector<8x128xf32>
    %c0_12 = arith.constant 0 : index
    %c0_13 = arith.constant 0 : index
    %21 = vector.load %arg6[%c0_12, %c0_13] : memref<1x128xf32, #tpu.memory_space<vmem>>, vector<1x128xf32>
    %22 = vector.broadcast %21 : vector<1x128xf32> to vector<8x128xf32>
    %23 = arith.addf %20, %22 : vector<8x128xf32>
    %24 = arith.negf %23 : vector<8x128xf32>
    %25 = math.exp %24 : vector<8x128xf32>
    %cst_14 = arith.constant 1.000000e+00 : f32
    %26 = vector.broadcast %cst_14 : f32 to vector<8x128xf32>
    %27 = arith.addf %26, %25 : vector<8x128xf32>
    %28 = arith.divf %26, %27 : vector<8x128xf32>
    %29 = arith.mulf %23, %28 : vector<8x128xf32>
    %30 = arith.truncf %29 : vector<8x128xf32> to vector<8x128xbf16>
    %c0_15 = arith.constant 0 : index
    %c0_16 = arith.constant 0 : index
    %31 = vector.load %arg7[%c0_15, %c0_16] : memref<128x128xbf16, #tpu.memory_space<vmem>>, vector<128x128xbf16>
    %cst_17 = arith.constant dense<0.000000e+00> : vector<8x128xf32>
    %32 = tpu.matmul %30, %31, %cst_17 {dimension_numbers = #tpu.dot_dimension_numbers<[1], [0], [0], [1], [0, 0, 1, 1], [], []>} : vector<8x128xbf16>, vector<128x128xbf16>, vector<8x128xf32> -> vector<8x128xf32>
    %c0_18 = arith.constant 0 : index
    %c0_19 = arith.constant 0 : index
    %33 = vector.load %arg8[%c0_18, %c0_19] : memref<1x128xf32, #tpu.memory_space<vmem>>, vector<1x128xf32>
    %34 = vector.broadcast %33 : vector<1x128xf32> to vector<8x128xf32>
    %35 = arith.addf %32, %34 : vector<8x128xf32>
    %36 = arith.negf %35 : vector<8x128xf32>
    %37 = math.exp %36 : vector<8x128xf32>
    %cst_20 = arith.constant 1.000000e+00 : f32
    %38 = vector.broadcast %cst_20 : f32 to vector<8x128xf32>
    %39 = arith.addf %38, %37 : vector<8x128xf32>
    %40 = arith.divf %38, %39 : vector<8x128xf32>
    %41 = arith.mulf %35, %40 : vector<8x128xf32>
    %42 = arith.truncf %41 : vector<8x128xf32> to vector<8x128xbf16>
    %c0_21 = arith.constant 0 : index
    %c0_22 = arith.constant 0 : index
    %43 = vector.load %arg9[%c0_21, %c0_22] : memref<128x256xbf16, #tpu.memory_space<vmem>>, vector<128x256xbf16>
    %cst_23 = arith.constant dense<0.000000e+00> : vector<8x256xf32>
    %44 = tpu.matmul %42, %43, %cst_23 {dimension_numbers = #tpu.dot_dimension_numbers<[1], [0], [0], [1], [0, 0, 1, 1], [], []>} : vector<8x128xbf16>, vector<128x256xbf16>, vector<8x256xf32> -> vector<8x256xf32>
    %c0_24 = arith.constant 0 : index
    %c0_25 = arith.constant 0 : index
    %45 = vector.load %arg10[%c0_24, %c0_25] : memref<1x256xf32, #tpu.memory_space<vmem>>, vector<1x256xf32>
    %46 = vector.broadcast %45 : vector<1x256xf32> to vector<8x256xf32>
    %47 = arith.addf %44, %46 : vector<8x256xf32>
    %cst_26 = arith.constant 0.000000e+00 : f32
    %48 = vector.broadcast %cst_26 : f32 to vector<8x256xf32>
    %49 = arith.maximumf %47, %48 : vector<8x256xf32>
    %50 = vector.broadcast %cst_26 : f32 to vector<8x256xf32>
    %51 = arith.subf %47, %50 : vector<8x256xf32>
    %52 = arith.cmpf one, %51, %51 : vector<8x256xf32>
    %53 = vector.broadcast %cst_26 : f32 to vector<8x256xf32>
    %54 = arith.addf %47, %53 : vector<8x256xf32>
    %55 = math.absf %51 : vector<8x256xf32>
    %cst_27 = arith.constant 0.000000e+00 : f32
    %56 = vector.broadcast %cst_27 : f32 to vector<8x256xf32>
    %57 = arith.subf %56, %55 : vector<8x256xf32>
    %58 = math.exp %57 : vector<8x256xf32>
    %59 = math.log1p %58 : vector<8x256xf32>
    %60 = arith.addf %49, %59 : vector<8x256xf32>
    %61 = arith.select %52, %54, %60 : vector<8x256xi1>, vector<8x256xf32>
    %62 = arith.truncf %61 : vector<8x256xf32> to vector<8x256xbf16>
    %c0_28 = arith.constant 0 : index
    %c0_29 = arith.constant 0 : index
    %63 = vector.load %arg11[%c0_28, %c0_29] : memref<8x256xbf16, #tpu.memory_space<vmem>>, vector<8x256xbf16>
    tpu.vector_store %arg11[%c0_28, %c0_29], %62 {strides = array<i32>} : memref<8x256xbf16, #tpu.memory_space<vmem>>, vector<8x256xbf16>,
    return
  }
  func.func @transform_0(%arg0: i32) -> (i32, i32) {
    %c0_i32 = arith.constant 0 : i32
    %c0_i32_0 = arith.constant 0 : i32
    return %arg0, %c0_i32 : i32, i32
  }
  func.func @transform_1(%arg0: i32) -> (i32, i32) {
    %c0_i32 = arith.constant 0 : i32
    %c0_i32_0 = arith.constant 0 : i32
    return %arg0, %c0_i32 : i32, i32
  }
  func.func @transform_2(%arg0: i32) -> (i32, i32) {
    %c0_i32 = arith.constant 0 : i32
    %c0_i32_0 = arith.constant 0 : i32
    %c0_i32_1 = arith.constant 0 : i32
    return %c0_i32, %c0_i32_0 : i32, i32
  }
  func.func @transform_3(%arg0: i32) -> (i32, i32) {
    %c0_i32 = arith.constant 0 : i32
    %c0_i32_0 = arith.constant 0 : i32
    %c0_i32_1 = arith.constant 0 : i32
    return %c0_i32, %c0_i32_0 : i32, i32
  }
  func.func @transform_4(%arg0: i32) -> (i32, i32) {
    %c0_i32 = arith.constant 0 : i32
    %c0_i32_0 = arith.constant 0 : i32
    %c0_i32_1 = arith.constant 0 : i32
    return %c0_i32, %c0_i32_0 : i32, i32
  }
  func.func @transform_5(%arg0: i32) -> (i32, i32) {
    %c0_i32 = arith.constant 0 : i32
    %c0_i32_0 = arith.constant 0 : i32
    %c0_i32_1 = arith.constant 0 : i32
    return %c0_i32, %c0_i32_0 : i32, i32
  }
  func.func @transform_6(%arg0: i32) -> (i32, i32) {
    %c0_i32 = arith.constant 0 : i32
    %c0_i32_0 = arith.constant 0 : i32
    %c0_i32_1 = arith.constant 0 : i32
    return %c0_i32, %c0_i32_0 : i32, i32
  }
  func.func @transform_7(%arg0: i32) -> (i32, i32) {
    %c0_i32 = arith.constant 0 : i32
    %c0_i32_0 = arith.constant 0 : i32
    %c0_i32_1 = arith.constant 0 : i32
    return %c0_i32, %c0_i32_0 : i32, i32
  }
  func.func @transform_8(%arg0: i32) -> (i32, i32) {
    %c0_i32 = arith.constant 0 : i32
    %c0_i32_0 = arith.constant 0 : i32
    %c0_i32_1 = arith.constant 0 : i32
    return %c0_i32, %c0_i32_0 : i32, i32
  }
  func.func @transform_9(%arg0: i32) -> (i32, i32) {
    %c0_i32 = arith.constant 0 : i32
    %c0_i32_0 = arith.constant 0 : i32
    %c0_i32_1 = arith.constant 0 : i32
    return %c0_i32, %c0_i32_0 : i32, i32
  }
  func.func @transform_10(%arg0: i32) -> (i32, i32) {
    %c0_i32 = arith.constant 0 : i32
    %c0_i32_0 = arith.constant 0 : i32
    return %arg0, %c0_i32 : i32, i32
  }
}

</mosaic_0001>

<llo_original>
// kernel: tpu_custom_call.1
$region0: #{tpu_custom_call.1}
  #allocation0 [shape = 'u32[]', space=smem, size = 0x4, offset = 0x4, fixed_abs, tag = 'smem constant byte address 0x4 - core index']
  #allocation1 [shape = 'u32[144,128]{1,0:T(1,128)}', space=vmem, size = 0x12000, scoped, tag = 'internal scratch']
  %s0 = inlined_call_operand.vmem [shape: s32[8,1], index: 0, kind: input, shape index: {}]
  %s1 = inlined_call_operand.vmem [shape: bf16[8,64], index: 1, kind: input, shape index: {}]
  %s2 = inlined_call_operand.hbm [shape: bf16[64,128], index: 2, kind: input, shape index: {}]
  %s3 = inlined_call_operand.vmem [shape: f32[8,128], index: 3, kind: input, shape index: {}]
  %s4 = inlined_call_operand.hbm [shape: bf16[128,128], index: 4, kind: input, shape index: {}]
  %s5 = inlined_call_operand.vmem [shape: f32[1,128], index: 5, kind: input, shape index: {}]
  %s6 = inlined_call_operand.hbm [shape: bf16[128,128], index: 6, kind: input, shape index: {}]
  %s7 = inlined_call_operand.vmem [shape: f32[1,128], index: 7, kind: input, shape index: {}]
  %s8 = inlined_call_operand.hbm [shape: bf16[128,256], index: 8, kind: input, shape index: {}]
  %s9 = inlined_call_operand.vmem [shape: f32[1,256], index: 9, kind: input, shape index: {}]
  %s10 = inlined_call_operand.hbm [shape: bf16[8,256], index: 10, kind: output, shape index: {}]
  %s11 = sld [smem:[#allocation0]]
  $region66: #{tpu_custom_call.1} parent=0
    _
  %s13 = ssub.s32 1, %s11
  %s14 = scalar_select 0, %s13, %s11
  $region1: #{tpu_custom_call.1} parent=0
    #allocation2 [shape = 'u8[16384]{0}', space=vmem, size = 0x4000, scoped, tag = 'input window, operand 2, single buffered']
    #allocation3 [shape = 's32[1]{0}', space=sflag, size = 0x4, scoped, tag = 'scoped memory for tpu_custom_call.1']
    #allocation4 [shape = 's32[1]{0}', space=sflag, size = 0x4, scoped, tag = 'scoped memory for tpu_custom_call.1']
    #allocation5 [shape = 'u8[32768]{0}', space=vmem, size = 0x8000, scoped, tag = 'input window, operand 4, single buffered']
    #allocation6 [shape = 's32[1]{0}', space=sflag, size = 0x4, scoped, tag = 'scoped memory for tpu_custom_call.1']
    #allocation7 [shape = 'u8[32768]{0}', space=vmem, size = 0x8000, scoped, tag = 'input window, operand 6, single buffered']
    #allocation8 [shape = 'u8[65536]{0}', space=vmem, size = 0x10000, scoped, tag = 'input window, operand 8, single buffered']
    #allocation9 [shape = 's32[1]{0}', space=sflag, size = 0x4, scoped, tag = 'scoped memory for tpu_custom_call.1']
    #allocation10 [shape = 'u8[4096]{0}', space=vmem, size = 0x1000, scoped, tag = 'output window, operand 0, single buffered']
    %15 = vsyncpa [#allocation3], 0
    %16 = vsyncpa [#allocation6], 0
    %17 = vsyncpa [#allocation9], 0
    %18 = vsyncpa [#allocation4], 0
    // Predicated region
    $region2: #{tpu_custom_call.1} parent=1 // pred_check
      _
    $region3: #{tpu_custom_call.1} parent=1 // pred_check_branch
      %20 = sbr.rel (0) target = $region5
    $region4: #{tpu_custom_call.1} parent=1 // pred_region
      _
    $region5: #{tpu_custom_call.1} parent=1 // pred_fallthru
      _
    // Predicated region
    $region6: #{tpu_custom_call.1} parent=1 // pred_check
      _
    $region7: #{tpu_custom_call.1} parent=1 // pred_check_branch
      %22 = sbr.rel (0) target = $region9
    $region8: #{tpu_custom_call.1} parent=1 // pred_region
      _
    $region9: #{tpu_custom_call.1} parent=1 // pred_fallthru
      _
    // Predicated region
    $region10: #{tpu_custom_call.1} parent=1 // pred_check
      _
    $region11: #{tpu_custom_call.1} parent=1 // pred_check_branch
      %24 = sbr.rel (0) target = $region13
    $region12: #{tpu_custom_call.1} parent=1 // pred_region
      %s26 = ssub.s32 512, 512
      %27 = vsyncadd [#allocation3], %s26
      %s28 = sshll.u32 [#allocation2], 4
      %s29 = int_to_ptr.vmem [resolvable:$true] %s28
      %34 = dma.hbm_to_vmem [thread:$0]  %s2, 512, %s29, [#allocation3], 64, 64, 4
    $region13: #{tpu_custom_call.1} parent=1 // pred_fallthru
      _
    // Predicated region
    $region14: #{tpu_custom_call.1} parent=1 // pred_check
      _
    $region15: #{tpu_custom_call.1} parent=1 // pred_check_branch
      %36 = sbr.rel (0) target = $region17
    $region16: #{tpu_custom_call.1} parent=1 // pred_region
      _
    $region17: #{tpu_custom_call.1} parent=1 // pred_fallthru
      _
    // Predicated region
    $region18: #{tpu_custom_call.1} parent=1 // pred_check
      _
    $region19: #{tpu_custom_call.1} parent=1 // pred_check_branch
      %38 = sbr.rel (0) target = $region21
    $region20: #{tpu_custom_call.1} parent=1 // pred_region
      %s40 = ssub.s32 1024, 1024
      %41 = vsyncadd [#allocation6], %s40
      %s42 = sshll.u32 [#allocation5], 4
      %s43 = int_to_ptr.vmem [resolvable:$true] %s42
      %48 = dma.hbm_to_vmem [thread:$0]  %s4, 1024, %s43, [#allocation6], 64, 64, 4
    $region21: #{tpu_custom_call.1} parent=1 // pred_fallthru
      _
    // Predicated region
    $region22: #{tpu_custom_call.1} parent=1 // pred_check
      _
    $region23: #{tpu_custom_call.1} parent=1 // pred_check_branch
      %50 = sbr.rel (0) target = $region25
    $region24: #{tpu_custom_call.1} parent=1 // pred_region
      _
    $region25: #{tpu_custom_call.1} parent=1 // pred_fallthru
      _
    // Predicated region
    $region26: #{tpu_custom_call.1} parent=1 // pred_check
      _
    $region27: #{tpu_custom_call.1} parent=1 // pred_check_branch
      %52 = sbr.rel (0) target = $region29
    $region28: #{tpu_custom_call.1} parent=1 // pred_region
      %s54 = ssub.s32 1024, 1024
      %55 = vsyncadd [#allocation6], %s54
      %s56 = sshll.u32 [#allocation7], 4
      %s57 = int_to_ptr.vmem [resolvable:$true] %s56
      %62 = dma.hbm_to_vmem [thread:$0]  %s6, 1024, %s57, [#allocation6], 64, 64, 4
    $region29: #{tpu_custom_call.1} parent=1 // pred_fallthru
      _
    // Predicated region
    $region30: #{tpu_custom_call.1} parent=1 // pred_check
      _
    $region31: #{tpu_custom_call.1} parent=1 // pred_check_branch
      %64 = sbr.rel (0) target = $region33
    $region32: #{tpu_custom_call.1} parent=1 // pred_region
      _
    $region33: #{tpu_custom_call.1} parent=1 // pred_fallthru
      _
    // Predicated region
    $region34: #{tpu_custom_call.1} parent=1 // pred_check
      _
    $region35: #{tpu_custom_call.1} parent=1 // pred_check_branch
      %66 = sbr.rel (0) target = $region37
    $region36: #{tpu_custom_call.1} parent=1 // pred_region
      %s68 = ssub.s32 2048, 2048
      %69 = vsyncadd [#allocation9], %s68
      %s70 = sshll.u32 [#allocation8], 4
      %s71 = int_to_ptr.vmem [resolvable:$true] %s70
      %76 = dma.hbm_to_vmem [thread:$0]  %s8, 2048, %s71, [#allocation9], 128, 128, 8
    $region37: #{tpu_custom_call.1} parent=1 // pred_fallthru
      _
    // Predicated region
    $region38: #{tpu_custom_call.1} parent=1 // pred_check
      _
    $region39: #{tpu_custom_call.1} parent=1 // pred_check_branch
      %78 = sbr.rel (0) target = $region41
    $region40: #{tpu_custom_call.1} parent=1 // pred_region
      _
    $region41: #{tpu_custom_call.1} parent=1 // pred_fallthru
      _
    // Predicated region
    $region42: #{tpu_custom_call.1} parent=1 // pred_check
      _
    $region43: #{tpu_custom_call.1} parent=1 // pred_check_branch
      %80 = sbr.rel (0) target = $region45
    $region44: #{tpu_custom_call.1} parent=1 // pred_region
      %81 = dma.done [#allocation3], 512
    $region45: #{tpu_custom_call.1} parent=1 // pred_fallthru
      _
    // Predicated region
    $region46: #{tpu_custom_call.1} parent=1 // pred_check
      _
    $region47: #{tpu_custom_call.1} parent=1 // pred_check_branch
      %83 = sbr.rel (0) target = $region49
    $region48: #{tpu_custom_call.1} parent=1 // pred_region
      %84 = dma.done [#allocation6], 1024
    $region49: #{tpu_custom_call.1} parent=1 // pred_fallthru
      _
    // Predicated region
    $region50: #{tpu_custom_call.1} parent=1 // pred_check
      _
    $region51: #{tpu_custom_call.1} parent=1 // pred_check_branch
      %86 = sbr.rel (0) target = $region53
    $region52: #{tpu_custom_call.1} parent=1 // pred_region
      %87 = dma.done [#allocation6], 1024
    $region53: #{tpu_custom_call.1} parent=1 // pred_fallthru
      _
    // Predicated region
    $region54: #{tpu_custom_call.1} parent=1 // pred_check
      _
    $region55: #{tpu_custom_call.1} parent=1 // pred_check_branch
      %89 = sbr.rel (0) target = $region57
    $region56: #{tpu_custom_call.1} parent=1 // pred_region
      %90 = dma.done [#allocation9], 2048
    $region57: #{tpu_custom_call.1} parent=1 // pred_fallthru
      _
    %v92 = vld [vmem:[%s0] sm:$0xff]
    %v93 = vlaneseq
    %v94 = vand.u32 %v93, 127
    %95 = vset.pattern.permute.xlu0 0
    %96 = vperm.xlu0 %95, %v92
    %v97 = vpop.permute.xlu0 %96
    %vm98 = vcmp.eq.s32.totalorder %v97, %v94
    %v99 = vsel %vm98, 1, 0
    %v100 = vcvt.s32.f32 %v99
    %v101 = vld [vmem:[%s1] sm:$0xf]
    %v102 = vld [vmem:[#allocation2] sm:$0xf]
    %v103 = vld [vmem:[#allocation2 + $0x4] sm:$0xf]
    %v104 = vld [vmem:[#allocation2 + $0x8] sm:$0xf]
    %v105 = vld [vmem:[#allocation2 + $0xc] sm:$0xf]
    %v106 = vld [vmem:[#allocation2 + $0x10] sm:$0xf]
    %v107 = vld [vmem:[#allocation2 + $0x14] sm:$0xf]
    %v108 = vld [vmem:[#allocation2 + $0x18] sm:$0xf]
    %v109 = vld [vmem:[#allocation2 + $0x1c] sm:$0xf]
    %v110 = vld [vmem:[%s3] sm:$0xff]
    %vm111 = vcmask 64512
    %v113 = vsel %vm111, %v100, 0
    %115 = vmatprep.subr.mxu0 0.0
    %116 = vmatpush1.msra.mxu0 0.0
    %117 = vmatprep.subr.mxu0 0.0
    %118 = vmatpush1.msra.mxu0 0.0
    %119 = vmatprep.subr.mxu0 0.0
    %120 = vmatpush1.msra.mxu0 0.0
    %121 = vmatprep.subr.mxu0 0.0
    %122 = vmatpush1.msra.mxu0 0.0
    %123 = vmatprep.subr.mxu0 0.0
    %124 = vmatpush1.msra.mxu0 0.0
    %125 = vmatprep.subr.mxu0 0.0
    %126 = vmatpush1.msra.mxu0 0.0
    %127 = vmatprep.subr.mxu0 0.0
    %128 = vmatpush1.msra.mxu0 0.0
    %129 = vmatprep.subr.mxu0 0.0
    %130 = vmatpush1.msra.mxu0 0.0
    %131 = vmatprep.subr.mxu0 0.0
    %132 = vmatpush1.msra.mxu0 0.0
    %133 = vmatprep.subr.mxu0 0.0
    %134 = vmatpush1.msra.mxu0 0.0
    %135 = vmatprep.subr.mxu0 0.0
    %136 = vmatpush1.msra.mxu0 0.0
    %137 = vmatprep.subr.mxu0 0.0
    %138 = vmatpush1.msra.mxu0 0.0
    %139 = vmatprep.subr.mxu0 0.0
    %140 = vmatpush1.msra.mxu0 0.0
    %141 = vmatprep.subr.mxu0 0.0
    %142 = vmatpush1.msra.mxu0 0.0
    %143 = vmatprep.subr.mxu0 0.0
    %144 = vmatpush1.msra.mxu0 0.0
    %145 = vmatprep.subr.mxu0 0.0
    %146 = vmatpush1.msra.mxu0 %v110
    %147 = vmatprep.subr.mxu0 0.0
    %148 = vmatpush2.msra.mxu0 0.0
    %149 = vmatprep.subr.mxu0 0.0
    %150 = vmatpush2.msra.mxu0 0.0
    %151 = vmatprep.subr.mxu0 0.0
    %152 = vmatpush2.msra.mxu0 0.0
    %153 = vmatprep.subr.mxu0 0.0
    %154 = vmatpush2.msra.mxu0 0.0
    %155 = vmatprep.subr.mxu0 0.0
    %156 = vmatpush2.msra.mxu0 0.0
    %157 = vmatprep.subr.mxu0 0.0
    %158 = vmatpush2.msra.mxu0 0.0
    %159 = vmatprep.subr.mxu0 0.0
    %160 = vmatpush2.msra.mxu0 0.0
    %161 = vmatprep.subr.mxu0 0.0
    %162 = vmatpush2.msra.mxu0 0.0
    %163 = vmatprep.subr.mxu0 0.0
    %164 = vmatpush2.msra.mxu0 0.0
    %165 = vmatprep.subr.mxu0 0.0
    %166 = vmatpush2.msra.mxu0 0.0
    %167 = vmatprep.subr.mxu0 0.0
    %168 = vmatpush2.msra.mxu0 0.0
    %169 = vmatprep.subr.mxu0 0.0
    %170 = vmatpush2.msra.mxu0 0.0
    %171 = vmatprep.subr.mxu0 0.0
    %172 = vmatpush2.msra.mxu0 0.0
    %173 = vmatprep.subr.mxu0 0.0
    %174 = vmatpush2.msra.mxu0 0.0
    %175 = vmatprep.subr.mxu0 0.0
    %176 = vmatpush2.msra.mxu0 0.0
    %177 = vmatprep.subr.mxu0 0.0
    %178 = vmatpush2.msra.mxu0 0.0
    %179 = vmatprep.mubr.f32.mxu0 0.0
    %180 = vmatmul.mubr.f32.gmra.mxu0 %v113
    %v181 = vpop.f32.mrf.mxu0
    %v182 = vadd.f32 0.0, %v181
    %v183 = vpop.f32.mrf.mxu0
    %184 = vdwg.mxu0
    %v193 = vunpack.c.l.b16 %v102
    %v194 = vunpack.c.l.b16 %v103
    %v195 = vunpack.c.l.b16 %v104
    %v196 = vunpack.c.l.b16 %v105
    %v197 = vunpack.c.l.b16 %v106
    %v198 = vunpack.c.l.b16 %v107
    %v199 = vunpack.c.l.b16 %v108
    %v200 = vunpack.c.l.b16 %v109
    %v201 = vpack.c.b16 %v194, %v193
    %v202 = vpack.c.b16 %v196, %v195
    %v203 = vpack.c.b16 %v198, %v197
    %v204 = vpack.c.b16 %v200, %v199
    %vm209 = vcmask 523264
    %v211 = vsel %vm209, %v101, 0
    %213 = vmatprep.subr.bf16.mxu0 0
    %214 = vmatpush1.bf16.msra.mxu0 0
    %215 = vmatprep.subr.bf16.mxu0 0
    %216 = vmatpush1.bf16.msra.mxu0 0
    %217 = vmatprep.subr.bf16.mxu0 0
    %218 = vmatpush1.bf16.msra.mxu0 0
    %219 = vmatprep.subr.bf16.mxu0 0
    %220 = vmatpush1.bf16.msra.mxu0 0
    %221 = vmatprep.subr.bf16.mxu0 0
    %222 = vmatpush1.bf16.msra.mxu0 %v204
    %223 = vmatprep.subr.bf16.mxu0 0
    %224 = vmatpush1.bf16.msra.mxu0 %v203
    %225 = vmatprep.subr.bf16.mxu0 0
    %226 = vmatpush1.bf16.msra.mxu0 %v202
    %227 = vmatprep.subr.bf16.mxu0 0
    %228 = vmatpush1.bf16.msra.mxu0 %v201
    %229 = vmatprep.subr.bf16.mxu0 0
    %230 = vmatpush2.bf16.msra.mxu0 0
    %231 = vmatprep.subr.bf16.mxu0 0
    %232 = vmatpush2.bf16.msra.mxu0 0
    %233 = vmatprep.subr.bf16.mxu0 0
    %234 = vmatpush2.bf16.msra.mxu0 0
    %235 = vmatprep.subr.bf16.mxu0 0
    %236 = vmatpush2.bf16.msra.mxu0 0
    %237 = vmatprep.subr.bf16.mxu0 0
    %238 = vmatpush2.bf16.msra.mxu0 0
    %239 = vmatprep.subr.bf16.mxu0 0
    %240 = vmatpush2.bf16.msra.mxu0 0
    %241 = vmatprep.subr.bf16.mxu0 0
    %242 = vmatpush2.bf16.msra.mxu0 0
    %243 = vmatprep.subr.bf16.mxu0 0
    %244 = vmatpush2.bf16.msra.mxu0 0
    %245 = vmatprep.mubr.bf16.mxu0 0
    %246 = vmatmul.mubr.bf16.gmra.mxu0 %v211
    %v247 = vpop.f32.mrf.mxu0
    %v248 = vadd.f32 %v182, %v247
    %v249 = vpop.f32.mrf.mxu0
    %v250 = vpop.f32.mrf.mxu0
    %v251 = vpop.f32.mrf.mxu0
    %252 = vdwg.mxu0
    %v253 = vxor.u32 %v248, 2147483648
    %v254 = vmul.f32 %v253, 1.442695
    %v255 = vpow.pop %v254
    %v256 = vadd.f32 %v255, 1.0
    %v257 = vrcp.pop %v256
    %v258 = vmul.f32 1.0, %v257
    %v259 = vmul.f32 %v248, %v258
    %v260 = vpack.c.bf16 %v259, %v259
    %v261 = vld [vmem:[#allocation5] sm:$0xf]
    %v262 = vld [vmem:[#allocation5 + $0x4] sm:$0xf]
    %v263 = vld [vmem:[#allocation5 + $0x8] sm:$0xf]
    %v264 = vld [vmem:[#allocation5 + $0xc] sm:$0xf]
    %v265 = vld [vmem:[#allocation5 + $0x10] sm:$0xf]
    %v266 = vld [vmem:[#allocation5 + $0x14] sm:$0xf]
    %v267 = vld [vmem:[#allocation5 + $0x18] sm:$0xf]
    %v268 = vld [vmem:[#allocation5 + $0x1c] sm:$0xf]
    %v269 = vld [vmem:[#allocation5 + $0x20] sm:$0xf]
    %v270 = vld [vmem:[#allocation5 + $0x24] sm:$0xf]
    %v271 = vld [vmem:[#allocation5 + $0x28] sm:$0xf]
    %v272 = vld [vmem:[#allocation5 + $0x2c] sm:$0xf]
    %v273 = vld [vmem:[#allocation5 + $0x30] sm:$0xf]
    %v274 = vld [vmem:[#allocation5 + $0x34] sm:$0xf]
    %v275 = vld [vmem:[#allocation5 + $0x38] sm:$0xf]
    %v276 = vld [vmem:[#allocation5 + $0x3c] sm:$0xf]
    %v277 = vld [vmem:[%s5] sm:$0x1]
    %v279 = vlaneseq
    %v280 = vshrl.u32 %v279, 7
    %v281 = vsub.s32 0, %v280
    %v282 = vrot.slane %v277, %v281
    %v300 = vunpack.c.l.b16 %v261
    %v301 = vunpack.c.l.b16 %v262
    %v302 = vunpack.c.l.b16 %v263
    %v303 = vunpack.c.l.b16 %v264
    %v304 = vunpack.c.l.b16 %v265
    %v305 = vunpack.c.l.b16 %v266
    %v306 = vunpack.c.l.b16 %v267
    %v307 = vunpack.c.l.b16 %v268
    %v308 = vunpack.c.l.b16 %v269
    %v309 = vunpack.c.l.b16 %v270
    %v310 = vunpack.c.l.b16 %v271
    %v311 = vunpack.c.l.b16 %v272
    %v312 = vunpack.c.l.b16 %v273
    %v313 = vunpack.c.l.b16 %v274
    %v314 = vunpack.c.l.b16 %v275
    %v315 = vunpack.c.l.b16 %v276
    %v316 = vpack.c.b16 %v301, %v300
    %v317 = vpack.c.b16 %v303, %v302
    %v318 = vpack.c.b16 %v305, %v304
    %v319 = vpack.c.b16 %v307, %v306
    %v320 = vpack.c.b16 %v309, %v308
    %v321 = vpack.c.b16 %v311, %v310
    %v322 = vpack.c.b16 %v313, %v312
    %v323 = vpack.c.b16 %v315, %v314
    %332 = vmatprep.subr.bf16.mxu0 0
    %333 = vmatpush1.bf16.msra.mxu0 %v323
    %334 = vmatprep.subr.bf16.mxu0 0
    %335 = vmatpush1.bf16.msra.mxu0 %v322
    %336 = vmatprep.subr.bf16.mxu0 0
    %337 = vmatpush1.bf16.msra.mxu0 %v321
    %338 = vmatprep.subr.bf16.mxu0 0
    %339 = vmatpush1.bf16.msra.mxu0 %v320
    %340 = vmatprep.subr.bf16.mxu0 0
    %341 = vmatpush1.bf16.msra.mxu0 %v319
    %342 = vmatprep.subr.bf16.mxu0 0
    %343 = vmatpush1.bf16.msra.mxu0 %v318
    %344 = vmatprep.subr.bf16.mxu0 0
    %345 = vmatpush1.bf16.msra.mxu0 %v317
    %346 = vmatprep.subr.bf16.mxu0 0
    %347 = vmatpush1.bf16.msra.mxu0 %v316
    %348 = vmatprep.subr.bf16.mxu0 0
    %349 = vmatpush2.bf16.msra.mxu0 0
    %350 = vmatprep.subr.bf16.mxu0 0
    %351 = vmatpush2.bf16.msra.mxu0 0
    %352 = vmatprep.subr.bf16.mxu0 0
    %353 = vmatpush2.bf16.msra.mxu0 0
    %354 = vmatprep.subr.bf16.mxu0 0
    %355 = vmatpush2.bf16.msra.mxu0 0
    %356 = vmatprep.subr.bf16.mxu0 0
    %357 = vmatpush2.bf16.msra.mxu0 0
    %358 = vmatprep.subr.bf16.mxu0 0
    %359 = vmatpush2.bf16.msra.mxu0 0
    %360 = vmatprep.subr.bf16.mxu0 0
    %361 = vmatpush2.bf16.msra.mxu0 0
    %362 = vmatprep.subr.bf16.mxu0 0
    %363 = vmatpush2.bf16.msra.mxu0 0
    %364 = vmatprep.mubr.bf16.mxu0 0
    %365 = vmatmul.mubr.bf16.gmra.mxu0 %v260
    %v366 = vpop.f32.mrf.mxu0
    %v367 = vadd.f32 %v282, %v366
    %v368 = vpop.f32.mrf.mxu0
    %v369 = vpop.f32.mrf.mxu0
    %v370 = vpop.f32.mrf.mxu0
    %371 = vdwg.mxu0
    %v372 = vxor.u32 %v367, 2147483648
    %v373 = vmul.f32 %v372, 1.442695
    %v374 = vpow.pop %v373
    %v375 = vadd.f32 %v374, 1.0
    %v376 = vrcp.pop %v375
    %v377 = vmul.f32 1.0, %v376
    %v378 = vmul.f32 %v367, %v377
    %v379 = vpack.c.bf16 %v378, %v378
    %v380 = vld [vmem:[#allocation7] sm:$0xf]
    %v381 = vld [vmem:[#allocation7 + $0x4] sm:$0xf]
    %v382 = vld [vmem:[#allocation7 + $0x8] sm:$0xf]
    %v383 = vld [vmem:[#allocation7 + $0xc] sm:$0xf]
    %v384 = vld [vmem:[#allocation7 + $0x10] sm:$0xf]
    %v385 = vld [vmem:[#allocation7 + $0x14] sm:$0xf]
    %v386 = vld [vmem:[#allocation7 + $0x18] sm:$0xf]
    %v387 = vld [vmem:[#allocation7 + $0x1c] sm:$0xf]
    %v388 = vld [vmem:[#allocation7 + $0x20] sm:$0xf]
    %v389 = vld [vmem:[#allocation7 + $0x24] sm:$0xf]
    %v390 = vld [vmem:[#allocation7 + $0x28] sm:$0xf]
    %v391 = vld [vmem:[#allocation7 + $0x2c] sm:$0xf]
    %v392 = vld [vmem:[#allocation7 + $0x30] sm:$0xf]
    %v393 = vld [vmem:[#allocation7 + $0x34] sm:$0xf]
    %v394 = vld [vmem:[#allocation7 + $0x38] sm:$0xf]
    %v395 = vld [vmem:[#allocation7 + $0x3c] sm:$0xf]
    %v396 = vld [vmem:[%s7] sm:$0x1]
    %v398 = vlaneseq
    %v399 = vshrl.u32 %v398, 7
    %v400 = vsub.s32 0, %v399
    %v401 = vrot.slane %v396, %v400
    %v419 = vunpack.c.l.b16 %v380
    %v420 = vunpack.c.l.b16 %v381
    %v421 = vunpack.c.l.b16 %v382
    %v422 = vunpack.c.l.b16 %v383
    %v423 = vunpack.c.l.b16 %v384
    %v424 = vunpack.c.l.b16 %v385
    %v425 = vunpack.c.l.b16 %v386
    %v426 = vunpack.c.l.b16 %v387
    %v427 = vunpack.c.l.b16 %v388
    %v428 = vunpack.c.l.b16 %v389
    %v429 = vunpack.c.l.b16 %v390
    %v430 = vunpack.c.l.b16 %v391
    %v431 = vunpack.c.l.b16 %v392
    %v432 = vunpack.c.l.b16 %v393
    %v433 = vunpack.c.l.b16 %v394
    %v434 = vunpack.c.l.b16 %v395
    %v435 = vpack.c.b16 %v420, %v419
    %v436 = vpack.c.b16 %v422, %v421
    %v437 = vpack.c.b16 %v424, %v423
    %v438 = vpack.c.b16 %v426, %v425
    %v439 = vpack.c.b16 %v428, %v427
    %v440 = vpack.c.b16 %v430, %v429
    %v441 = vpack.c.b16 %v432, %v431
    %v442 = vpack.c.b16 %v434, %v433
    %451 = vmatprep.subr.bf16.mxu0 0
    %452 = vmatpush1.bf16.msra.mxu0 %v442
    %453 = vmatprep.subr.bf16.mxu0 0
    %454 = vmatpush1.bf16.msra.mxu0 %v441
    %455 = vmatprep.subr.bf16.mxu0 0
    %456 = vmatpush1.bf16.msra.mxu0 %v440
    %457 = vmatprep.subr.bf16.mxu0 0
    %458 = vmatpush1.bf16.msra.mxu0 %v439
    %459 = vmatprep.subr.bf16.mxu0 0
    %460 = vmatpush1.bf16.msra.mxu0 %v438
    %461 = vmatprep.subr.bf16.mxu0 0
    %462 = vmatpush1.bf16.msra.mxu0 %v437
    %463 = vmatprep.subr.bf16.mxu0 0
    %464 = vmatpush1.bf16.msra.mxu0 %v436
    %465 = vmatprep.subr.bf16.mxu0 0
    %466 = vmatpush1.bf16.msra.mxu0 %v435
    %467 = vmatprep.subr.bf16.mxu0 0
    %468 = vmatpush2.bf16.msra.mxu0 0
    %469 = vmatprep.subr.bf16.mxu0 0
    %470 = vmatpush2.bf16.msra.mxu0 0
    %471 = vmatprep.subr.bf16.mxu0 0
    %472 = vmatpush2.bf16.msra.mxu0 0
    %473 = vmatprep.subr.bf16.mxu0 0
    %474 = vmatpush2.bf16.msra.mxu0 0
    %475 = vmatprep.subr.bf16.mxu0 0
    %476 = vmatpush2.bf16.msra.mxu0 0
    %477 = vmatprep.subr.bf16.mxu0 0
    %478 = vmatpush2.bf16.msra.mxu0 0
    %479 = vmatprep.subr.bf16.mxu0 0
    %480 = vmatpush2.bf16.msra.mxu0 0
    %481 = vmatprep.subr.bf16.mxu0 0
    %482 = vmatpush2.bf16.msra.mxu0 0
    %483 = vmatprep.mubr.bf16.mxu0 0
    %484 = vmatmul.mubr.bf16.gmra.mxu0 %v379
    %v485 = vpop.f32.mrf.mxu0
    %v486 = vadd.f32 %v401, %v485
    %v487 = vpop.f32.mrf.mxu0
    %v488 = vpop.f32.mrf.mxu0
    %v489 = vpop.f32.mrf.mxu0
    %490 = vdwg.mxu0
    %v491 = vxor.u32 %v486, 2147483648
    %v492 = vmul.f32 %v491, 1.442695
    %v493 = vpow.pop %v492
    %v494 = vadd.f32 %v493, 1.0
    %v495 = vrcp.pop %v494
    %v496 = vmul.f32 1.0, %v495
    %v497 = vmul.f32 %v486, %v496
    %v498 = vpack.c.bf16 %v497, %v497
    %v499 = vld [vmem:[#allocation8] sm:$0xff]
    %v500 = vld [vmem:[#allocation8 + $0x8] sm:$0xff]
    %v501 = vld [vmem:[#allocation8 + $0x10] sm:$0xff]
    %v502 = vld [vmem:[#allocation8 + $0x18] sm:$0xff]
    %v503 = vld [vmem:[#allocation8 + $0x20] sm:$0xff]
    %v504 = vld [vmem:[#allocation8 + $0x28] sm:$0xff]
    %v505 = vld [vmem:[#allocation8 + $0x30] sm:$0xff]
    %v506 = vld [vmem:[#allocation8 + $0x38] sm:$0xff]
    %v507 = vld [vmem:[#allocation8 + $0x40] sm:$0xff]
    %v508 = vld [vmem:[#allocation8 + $0x48] sm:$0xff]
    %v509 = vld [vmem:[#allocation8 + $0x50] sm:$0xff]
    %v510 = vld [vmem:[#allocation8 + $0x58] sm:$0xff]
    %v511 = vld [vmem:[#allocation8 + $0x60] sm:$0xff]
    %v512 = vld [vmem:[#allocation8 + $0x68] sm:$0xff]
    %v513 = vld [vmem:[#allocation8 + $0x70] sm:$0xff]
    %v514 = vld [vmem:[#allocation8 + $0x78] sm:$0xff]
    %v515 = vld [vmem:[%s9] sm:$0x3]
    %v517 = vlaneseq
    %v518 = vshrl.u32 %v517, 7
    %v519 = vsub.s32 0, %v518
    %v520 = vrot.slane %v515, %v519
    %v521 = vlaneseq
    %v522 = vshrl.u32 %v521, 7
    %v523 = vsub.s32 1, %v522
    %v524 = vrot.slane %v515, %v523
    %v543 = vunpack.c.l.b16 %v499
    %v544 = vunpack.c.h.b16 %v499
    %v545 = vunpack.c.l.b16 %v500
    %v546 = vunpack.c.h.b16 %v500
    %v547 = vunpack.c.l.b16 %v501
    %v548 = vunpack.c.h.b16 %v501
    %v549 = vunpack.c.l.b16 %v502
    %v550 = vunpack.c.h.b16 %v502
    %v551 = vunpack.c.l.b16 %v503
    %v552 = vunpack.c.h.b16 %v503
    %v553 = vunpack.c.l.b16 %v504
    %v554 = vunpack.c.h.b16 %v504
    %v555 = vunpack.c.l.b16 %v505
    %v556 = vunpack.c.h.b16 %v505
    %v557 = vunpack.c.l.b16 %v506
    %v558 = vunpack.c.h.b16 %v506
    %v559 = vunpack.c.l.b16 %v507
    %v560 = vunpack.c.h.b16 %v507
    %v561 = vunpack.c.l.b16 %v508
    %v562 = vunpack.c.h.b16 %v508
    %v563 = vunpack.c.l.b16 %v509
    %v564 = vunpack.c.h.b16 %v509
    %v565 = vunpack.c.l.b16 %v510
    %v566 = vunpack.c.h.b16 %v510
    %v567 = vunpack.c.l.b16 %v511
    %v568 = vunpack.c.h.b16 %v511
    %v569 = vunpack.c.l.b16 %v512
    %v570 = vunpack.c.h.b16 %v512
    %v571 = vunpack.c.l.b16 %v513
    %v572 = vunpack.c.h.b16 %v513
    %v573 = vunpack.c.l.b16 %v514
    %v574 = vunpack.c.h.b16 %v514
    %v575 = vpack.c.b16 %v545, %v543
    %v576 = vpack.c.b16 %v546, %v544
    %v577 = vpack.c.b16 %v549, %v547
    %v578 = vpack.c.b16 %v550, %v548
    %v579 = vpack.c.b16 %v553, %v551
    %v580 = vpack.c.b16 %v554, %v552
    %v581 = vpack.c.b16 %v557, %v555
    %v582 = vpack.c.b16 %v558, %v556
    %v583 = vpack.c.b16 %v561, %v559
    %v584 = vpack.c.b16 %v562, %v560
    %v585 = vpack.c.b16 %v565, %v563
    %v586 = vpack.c.b16 %v566, %v564
    %v587 = vpack.c.b16 %v569, %v567
    %v588 = vpack.c.b16 %v570, %v568
    %v589 = vpack.c.b16 %v573, %v571
    %v590 = vpack.c.b16 %v574, %v572
    %607 = vmatprep.subr.bf16.mxu0 %v590
    %608 = vmatpush1.bf16.msra.mxu0 %v589
    %609 = vmatprep.subr.bf16.mxu0 %v588
    %610 = vmatpush1.bf16.msra.mxu0 %v587
    %611 = vmatprep.subr.bf16.mxu0 %v586
    %612 = vmatpush1.bf16.msra.mxu0 %v585
    %613 = vmatprep.subr.bf16.mxu0 %v584
    %614 = vmatpush1.bf16.msra.mxu0 %v583
    %615 = vmatprep.subr.bf16.mxu0 %v582
    %616 = vmatpush1.bf16.msra.mxu0 %v581
    %617 = vmatprep.subr.bf16.mxu0 %v580
    %618 = vmatpush1.bf16.msra.mxu0 %v579
    %619 = vmatprep.subr.bf16.mxu0 %v578
    %620 = vmatpush1.bf16.msra.mxu0 %v577
    %621 = vmatprep.subr.bf16.mxu0 %v576
    %622 = vmatpush1.bf16.msra.mxu0 %v575
    %623 = vmatprep.subr.bf16.mxu0 0
    %624 = vmatpush2.bf16.msra.mxu0 0
    %625 = vmatprep.subr.bf16.mxu0 0
    %626 = vmatpush2.bf16.msra.mxu0 0
    %627 = vmatprep.subr.bf16.mxu0 0
    %628 = vmatpush2.bf16.msra.mxu0 0
    %629 = vmatprep.subr.bf16.mxu0 0
    %630 = vmatpush2.bf16.msra.mxu0 0
    %631 = vmatprep.subr.bf16.mxu0 0
    %632 = vmatpush2.bf16.msra.mxu0 0
    %633 = vmatprep.subr.bf16.mxu0 0
    %634 = vmatpush2.bf16.msra.mxu0 0
    %635 = vmatprep.subr.bf16.mxu0 0
    %636 = vmatpush2.bf16.msra.mxu0 0
    %637 = vmatprep.subr.bf16.mxu0 0
    %638 = vmatpush2.bf16.msra.mxu0 0
    %639 = vmatprep.mubr.bf16.mxu0 0
    %640 = vmatmul.mubr.bf16.gmra.mxu0 %v498
    %v641 = vpop.f32.mrf.mxu0
    %v642 = vadd.f32 %v520, %v641
    %v643 = vpop.f32.mrf.mxu0
    %v644 = vadd.f32 %v524, %v643
    %v645 = vpop.f32.mrf.mxu0
    %v646 = vpop.f32.mrf.mxu0
    %647 = vdwg.mxu0
    %v648 = vmax.f32 %v642, 0.0
    %v649 = vmax.f32 %v644, 0.0
    %vm650 = vcmp.ne.f32.partialorder %v642, %v642
    %vm651 = vcmp.ne.f32.partialorder %v644, %v644
    %v652 = vadd.f32 %v642, 0.0
    %v653 = vadd.f32 %v644, 0.0
    %v654 = vand.u32 2147483647, %v642
    %v655 = vand.u32 2147483647, %v644
    %v656 = vsub.f32 0.0, %v654
    %v657 = vsub.f32 0.0, %v655
    %v658 = vmul.f32 %v656, 1.442695
    %v659 = vpow.pop %v658
    %v660 = vmul.f32 %v657, 1.442695
    %v661 = vpow.pop %v660
    %v662 = vadd.f32 %v659, 1.0
    %v663 = vlog2.pop %v662
    %v664 = vmul.f32 %v663, 0.6931472
    %v665 = vmul.f32 -0.5, %v659
    %v666 = vadd.f32 %v665, 1.0
    %v667 = vmul.f32 %v666, %v659
    %v668 = vand.u32 2147483647, %v659
    %vm669 = vcmp.lt.f32.partialorder %v668, 0.0004427343
    %v670 = vsel %vm669, %v667, %v664
    %v671 = vadd.f32 %v661, 1.0
    %v672 = vlog2.pop %v671
    %v673 = vmul.f32 %v672, 0.6931472
    %v674 = vmul.f32 -0.5, %v661
    %v675 = vadd.f32 %v674, 1.0
    %v676 = vmul.f32 %v675, %v661
    %v677 = vand.u32 2147483647, %v661
    %vm678 = vcmp.lt.f32.partialorder %v677, 0.0004427343
    %v679 = vsel %vm678, %v676, %v673
    %v680 = vadd.f32 %v648, %v670
    %v681 = vadd.f32 %v649, %v679
    %v682 = vsel %vm650, %v652, %v680
    %v683 = vsel %vm651, %v653, %v681
    %v684 = vpack.c.bf16 %v682, %v682
    %v685 = vpack.c.bf16 %v683, %v683
    %v688 = vunpack.c.l.b16 %v684
    %v689 = vunpack.c.l.b16 %v685
    %v690 = vpack.c.b16 %v689, %v688
    %692 = vst [vmem:[#allocation10] sm:$0xff] %v690
    // Predicated region
    $region58: #{tpu_custom_call.1} parent=1 // pred_check
      _
    $region59: #{tpu_custom_call.1} parent=1 // pred_check_branch
      %694 = sbr.rel (0) target = $region61
    $region60: #{tpu_custom_call.1} parent=1 // pred_region
      %s696 = ssub.s32 128, 128
      %697 = vsyncadd [#allocation4], %s696
      %s699 = sshll.u32 [#allocation10], 4
      %s700 = int_to_ptr.vmem [resolvable:$true] %s699
      %702 = dma.vmem_to_hbm [thread:$0]  %s700, 128, %s10, [#allocation4]
    $region61: #{tpu_custom_call.1} parent=1 // pred_fallthru
      _
    // Predicated region
    $region62: #{tpu_custom_call.1} parent=1 // pred_check
      _
    $region63: #{tpu_custom_call.1} parent=1 // pred_check_branch
      %704 = sbr.rel (0) target = $region65
    $region64: #{tpu_custom_call.1} parent=1 // pred_region
      %705 = dma.done [#allocation4], 128
    $region65: #{tpu_custom_call.1} parent=1 // pred_fallthru
      _
    %706 = vsyncpa [#allocation3], 1
    %707 = vsyncpa [#allocation6], 1
    %708 = vsyncpa [#allocation9], 1
    %709 = vsyncpa [#allocation4], 1

</llo_original>
